<compile_context>
chip_gen: v7x
topology: tpu7x:2x2x1
jax: 0.10.0
libtpu: 0.0.40
codegen_flags: <defaults>
</compile_context>

<pallas_src>
import functools

import jax
import jax.numpy as jnp
from jax.experimental import pallas as pl
from jax.experimental.pallas import tpu as pltpu

ALPHA = 0.05
LANES = 128
SUBLANES = 8


def _num_tensorcores():
    # v7x has 2 TensorCores per chip; v5e/v6e (and anything unrecognised)
    # get 1 -- always correct, just no cross-core split.
    try:
        kind = jax.devices()[0].device_kind.lower()
    except Exception:
        return 1
    return 2 if "v7" in kind else 1


def _bce_blur_kernel(pred_ref, true_ref, o_ref, acc_ref, *,
                     inv_blur, n_valid, block_rows, full_blocks, needs_mask):
    c = pl.program_id(0)                      # core ("parallel") axis
    i = pl.program_id(1)                      # reduction ("arbitrary") axis
    steps = pl.num_programs(1)
    b = c * steps + i                         # linear block index

    @pl.when(i == 0)
    def _init():
        acc_ref[...] = jnp.zeros_like(acc_ref)

    x = pred_ref[...].astype(jnp.float32)
    t = true_ref[...].astype(jnp.float32)

    # Numerically-stable BCE-with-logits, sharing e = exp(-|x|) with sigmoid.
    e = jnp.exp(-jnp.abs(x))
    loss = jnp.maximum(x, 0.0) - x * t + jnp.log1p(e)
    p = jnp.where(x >= 0.0, 1.0, e) / (1.0 + e)           # sigmoid(x)
    loss = loss * (1.0 - jnp.exp((p - t - 1.0) * inv_blur))

    def _accumulate(v):
        # Layout-preserving split into vreg row-tiles + axis-0 sum: pure VPU
        # adds into an (8,128) accumulator (single XLU reduce in epilogue).
        acc_ref[...] += v.reshape(block_rows // SUBLANES, SUBLANES, LANES
                                  ).sum(axis=0)

    if needs_mask:
        # Only the ragged last real block and phantom step(s) pay the mask.
        @pl.when(b >= full_blocks)
        def _masked():
            row = jax.lax.broadcasted_iota(jnp.int32, loss.shape, 0)
            lane = jax.lax.broadcasted_iota(jnp.int32, loss.shape, 1)
            idx = (b * block_rows + row) * LANES + lane
            _accumulate(jnp.where(idx < n_valid, loss, 0.0))

        @pl.when(b < full_blocks)
        def _full():
            _accumulate(loss)
    else:
        _accumulate(loss)

    @pl.when(i == steps - 1)
    def _finalize():
        # Single cross-sublane reduce; lane-dense (1,1,128) slab per core.
        o_ref[...] = jnp.sum(acc_ref[...], axis=0, keepdims=True).reshape(
            1, 1, LANES)


def bce_blur_with_logits_loss(pred, true, alpha=ALPHA):
    assert pred.shape == true.shape
    n = int(pred.size)
    assert n > 0

    # Keep native dtype (bf16 stays bf16 in HBM); upcast happens in-kernel.
    pred_f = pred.reshape(-1)
    true_f = true.reshape(-1)

    # Lane alignment only: pad < 128 elements iff n % 128 != 0.  Ragged rows,
    # ragged blocks and core parity never trigger a pad any more (handled by
    # the in-kernel mask).
    # TODO(synk): even this sub-vreg pad is a full HBM copy in XLA; a 1-D
    # block layout would remove it for lane-unaligned n.
    rem = n % LANES
    if rem:
        pred_f = jnp.pad(pred_f, (0, LANES - rem))
        true_f = jnp.pad(true_f, (0, LANES - rem))
    rows = pl.cdiv(n, LANES)

    # dtype-aware tile: each input DMA stays around 512 KiB.
    itemsize = jnp.dtype(pred.dtype).itemsize
    max_block_rows = 2048 if itemsize <= 2 else 1024

    if rows <= max_block_rows:
        block_rows = pl.cdiv(rows, SUBLANES) * SUBLANES
        num_blocks = 1
    else:
        block_rows = max_block_rows
        num_blocks = pl.cdiv(rows, block_rows)

    # 2-TC split only where it exists (v7x).  Surplus steps on an odd block
    # count re-read an in-bounds block and are masked to zero in-kernel.
    num_cores = _num_tensorcores() if num_blocks >= 2 else 1
    steps_per_core = pl.cdiv(num_blocks, num_cores)
    total_steps = num_cores * steps_per_core

    block_elems = block_rows * LANES
    full_blocks = n // block_elems            # blocks with no invalid element
    needs_mask = full_blocks < total_steps

    pred2 = pred_f.reshape(rows, LANES)
    true2 = true_f.reshape(rows, LANES)

    if total_steps == num_blocks:
        def in_map(c, i):
            return (c * steps_per_core + i, 0)
    else:
        def in_map(c, i):                     # clamp phantom steps in-bounds
            return (jnp.minimum(c * steps_per_core + i, num_blocks - 1), 0)

    kernel = functools.partial(
        _bce_blur_kernel,
        inv_blur=float(1.0 / (alpha + 0.0001)),
        n_valid=n,
        block_rows=block_rows,
        full_blocks=full_blocks,
        needs_mask=needs_mask,
    )

    partial_sums = pl.pallas_call(
        kernel,
        out_shape=jax.ShapeDtypeStruct((num_cores, 1, LANES), jnp.float32),
        grid_spec=pltpu.PrefetchScalarGridSpec(
            num_scalar_prefetch=0,
            grid=(num_cores, steps_per_core),
            in_specs=[
                pl.BlockSpec((block_rows, LANES), in_map),
                pl.BlockSpec((block_rows, LANES), in_map),
            ],
            out_specs=pl.BlockSpec((1, 1, LANES), lambda c, i: (c, 0, 0)),
            scratch_shapes=[pltpu.VMEM((SUBLANES, LANES), jnp.float32)],
        ),
        compiler_params=pltpu.CompilerParams(
            dimension_semantics=("parallel", "arbitrary"),
        ),
    )(pred2, true2)

    # Tiny final reduction + mean in XLA (masked elements contributed 0).
    return jnp.sum(partial_sums) / jnp.float32(n)


def _reference(pred, true, alpha=ALPHA):
    x = pred.astype(jnp.float32)
    t = true.astype(jnp.float32)
    loss = jnp.maximum(x, 0.0) - x * t + jnp.log1p(jnp.exp(-jnp.abs(x)))
    p = jax.nn.sigmoid(x)
    loss = loss * (1.0 - jnp.exp((p - t - 1.0) / (alpha + 0.0001)))
    return jnp.mean(loss)


if __name__ == "__main__":
    key = jax.random.PRNGKey(0)
    k1, k2, k3, k4 = jax.random.split(key, 4)

    # NCHW-shaped logits / targets, as a YOLO objectness/cls head would emit.
    shape = (2, 4, 16, 16)
    pred = jax.random.normal(k1, shape, dtype=jnp.float32) * 2.0
    true = (jax.random.uniform(k2, shape) > 0.5).astype(jnp.float32)

    out = jax.block_until_ready(bce_blur_with_logits_loss(pred, true))
    ref = _reference(pred, true)
    assert jnp.allclose(out, ref, atol=1e-5, rtol=1e-5), (out, ref)

    # Lane-ragged size (n % 128 != 0) to exercise the in-kernel mask path.
    shape2 = (2, 5, 100)
    pred2 = jax.random.normal(k3, shape2, dtype=jnp.float32) * 2.0
    true2 = (jax.random.uniform(k4, shape2) > 0.5).astype(jnp.float32)

    out2 = jax.block_until_ready(bce_blur_with_logits_loss(pred2, true2))
    ref2 = _reference(pred2, true2)
    assert jnp.allclose(out2, ref2, atol=1e-5, rtol=1e-5), (out2, ref2)

    print("KERNEL_OK")
</pallas_src>

<mosaic_0001>
module attributes {stable_mosaic.version = 11 : i64} {
  func.func @_bce_blur_kernel(%arg0: i32, %arg1: i32, %arg2: memref<16x128xf32, #tpu.memory_space<vmem>>, %arg3: memref<16x128xf32, #tpu.memory_space<vmem>>, %arg4: memref<1x1x128xf32, #tpu.memory_space<vmem>>, %arg5: memref<8x128xf32, #tpu.memory_space<vmem>>) attributes {dimension_semantics = [#tpu.dimension_semantics<parallel>, #tpu.dimension_semantics<arbitrary>], iteration_bounds = array<i64: 1, 1>, scalar_prefetch = 0 : i64, scratch_operands = 1 : i64, tpu.core_type = #tpu.core_type<tc>, window_params = [{transform_indices = @transform_0, window_bounds = array<i64: 16, 128>}, {transform_indices = @transform_1, window_bounds = array<i64: 16, 128>}, {transform_indices = @transform_2, window_bounds = array<i64: 1, 1, 128>}]} {
    %c0_i32 = arith.constant 0 : i32
    %0 = arith.cmpi eq, %arg1, %c0_i32 : i32
    %1 = arith.extui %0 : i1 to i32
    %c0_i32_0 = arith.constant 0 : i32
    %2 = arith.cmpi ne, %1, %c0_i32_0 : i32
    scf.if %2 {
      %cst_18 = arith.constant 0.000000e+00 : f32
      %39 = vector.broadcast %cst_18 : f32 to vector<8x128xf32>
      %c0_19 = arith.constant 0 : index
      %c0_20 = arith.constant 0 : index
      %40 = vector.load %arg5[%c0_19, %c0_20] : memref<8x128xf32, #tpu.memory_space<vmem>>, vector<8x128xf32>
      tpu.vector_store %arg5[%c0_19, %c0_20], %39 {strides = array<i32>} : memref<8x128xf32, #tpu.memory_space<vmem>>, vector<8x128xf32>,
    } else {
    }
    %c0 = arith.constant 0 : index
    %c0_1 = arith.constant 0 : index
    %3 = vector.load %arg2[%c0, %c0_1] : memref<16x128xf32, #tpu.memory_space<vmem>>, vector<16x128xf32>
    %c0_2 = arith.constant 0 : index
    %c0_3 = arith.constant 0 : index
    %4 = vector.load %arg3[%c0_2, %c0_3] : memref<16x128xf32, #tpu.memory_space<vmem>>, vector<16x128xf32>
    %5 = math.absf %3 : vector<16x128xf32>
    %cst = arith.constant 0.000000e+00 : f32
    %6 = vector.broadcast %cst : f32 to vector<16x128xf32>
    %7 = arith.subf %6, %5 : vector<16x128xf32>
    %8 = math.exp %7 : vector<16x128xf32>
    %cst_4 = arith.constant 0.000000e+00 : f32
    %9 = vector.broadcast %cst_4 : f32 to vector<16x128xf32>
    %10 = arith.maximumf %3, %9 : vector<16x128xf32>
    %11 = arith.mulf %3, %4 : vector<16x128xf32>
    %12 = arith.subf %10, %11 : vector<16x128xf32>
    %13 = math.log1p %8 : vector<16x128xf32>
    %14 = arith.addf %12, %13 : vector<16x128xf32>
    %cst_5 = arith.constant 0.000000e+00 : f32
    %15 = vector.broadcast %cst_5 : f32 to vector<16x128xf32>
    %16 = arith.cmpf oge, %3, %15 : vector<16x128xf32>
    %cst_6 = arith.constant 1.000000e+00 : f32
    %17 = vector.broadcast %cst_6 : f32 to vector<16x128xf32>
    %18 = arith.select %16, %17, %8 : vector<16x128xi1>, vector<16x128xf32>
    %cst_7 = arith.constant 1.000000e+00 : f32
    %19 = vector.broadcast %cst_7 : f32 to vector<16x128xf32>
    %20 = arith.addf %19, %8 : vector<16x128xf32>
    %21 = arith.divf %18, %20 : vector<16x128xf32>
    %22 = arith.subf %21, %4 : vector<16x128xf32>
    %cst_8 = arith.constant 1.000000e+00 : f32
    %23 = vector.broadcast %cst_8 : f32 to vector<16x128xf32>
    %24 = arith.subf %22, %23 : vector<16x128xf32>
    %cst_9 = arith.constant 19.9600792 : f32
    %25 = vector.broadcast %cst_9 : f32 to vector<16x128xf32>
    %26 = arith.mulf %24, %25 : vector<16x128xf32>
    %27 = math.exp %26 : vector<16x128xf32>
    %cst_10 = arith.constant 1.000000e+00 : f32
    %28 = vector.broadcast %cst_10 : f32 to vector<16x128xf32>
    %29 = arith.subf %28, %27 : vector<16x128xf32>
    %30 = arith.mulf %14, %29 : vector<16x128xf32>
    %c0_11 = arith.constant 0 : index
    %c0_12 = arith.constant 0 : index
    %31 = vector.load %arg5[%c0_11, %c0_12] : memref<8x128xf32, #tpu.memory_space<vmem>>, vector<8x128xf32>
    %32 = vector.shape_cast %30 : vector<16x128xf32> to vector<2x8x128xf32>
    %cst_13 = arith.constant dense<0.000000e+00> : vector<8x128xf32>
    %33 = vector.multi_reduction <add>, %32, %cst_13 [0] : vector<2x8x128xf32> to vector<8x128xf32>
    %34 = arith.addf %31, %33 : vector<8x128xf32>
    %c0_14 = arith.constant 0 : index
    %c0_15 = arith.constant 0 : index
    %35 = vector.load %arg5[%c0_14, %c0_15] : memref<8x128xf32, #tpu.memory_space<vmem>>, vector<8x128xf32>
    tpu.vector_store %arg5[%c0_14, %c0_15], %34 {strides = array<i32>} : memref<8x128xf32, #tpu.memory_space<vmem>>, vector<8x128xf32>,
    %c0_i32_16 = arith.constant 0 : i32
    %36 = arith.cmpi eq, %arg1, %c0_i32_16 : i32
    %37 = arith.extui %36 : i1 to i32
    %c0_i32_17 = arith.constant 0 : i32
    %38 = arith.cmpi ne, %37, %c0_i32_17 : i32
    scf.if %38 {
      %c0_18 = arith.constant 0 : index
      %c0_19 = arith.constant 0 : index
      %39 = vector.load %arg5[%c0_18, %c0_19] : memref<8x128xf32, #tpu.memory_space<vmem>>, vector<8x128xf32>
      %cst_20 = arith.constant dense<0.000000e+00> : vector<128xf32>
      %40 = vector.multi_reduction <add>, %39, %cst_20 [0] : vector<8x128xf32> to vector<128xf32>
      %41 = vector.shape_cast %40 : vector<128xf32> to vector<1x128xf32>
      %42 = vector.shape_cast %41 : vector<1x128xf32> to vector<1x1x128xf32>
      %c0_21 = arith.constant 0 : index
      %c0_22 = arith.constant 0 : index
      %c0_23 = arith.constant 0 : index
      %43 = vector.load %arg4[%c0_21, %c0_22, %c0_23] : memref<1x1x128xf32, #tpu.memory_space<vmem>>, vector<1x1x128xf32>
      tpu.vector_store %arg4[%c0_21, %c0_22, %c0_23], %42 {strides = array<i32>} : memref<1x1x128xf32, #tpu.memory_space<vmem>>, vector<1x1x128xf32>,
    } else {
    }
    return
  }
  func.func @transform_0(%arg0: i32, %arg1: i32) -> (i32, i32) {
    %c1_i32 = arith.constant 1 : i32
    %0 = arith.muli %arg0, %c1_i32 : i32
    %1 = arith.addi %0, %arg1 : i32
    %c0_i32 = arith.constant 0 : i32
    %c0_i32_0 = arith.constant 0 : i32
    return %1, %c0_i32 : i32, i32
  }
  func.func @transform_1(%arg0: i32, %arg1: i32) -> (i32, i32) {
    %c1_i32 = arith.constant 1 : i32
    %0 = arith.muli %arg0, %c1_i32 : i32
    %1 = arith.addi %0, %arg1 : i32
    %c0_i32 = arith.constant 0 : i32
    %c0_i32_0 = arith.constant 0 : i32
    return %1, %c0_i32 : i32, i32
  }
  func.func @transform_2(%arg0: i32, %arg1: i32) -> (i32, i32, i32) {
    %c0_i32 = arith.constant 0 : i32
    %c0_i32_0 = arith.constant 0 : i32
    %c0_i32_1 = arith.constant 0 : i32
    return %arg0, %c0_i32, %c0_i32_0 : i32, i32, i32
  }
}

</mosaic_0001>

<llo_original>
// kernel: tpu_custom_call.1
$region0: #{tpu_custom_call.1}
  #allocation0 [shape = 'u32[]', space=smem, size = 0x4, offset = 0x4, fixed_abs, tag = 'smem constant byte address 0x4 - core index']
  #allocation1 [shape = 'u32[144,128]{1,0:T(1,128)}', space=vmem, size = 0x12000, scoped, tag = 'internal scratch']
  #allocation2 [shape = 'f32[8,128]{1,0:T(8,128)}', space=vmem, size = 0x1000, scoped, tag = 'scratch operand']
  %s0 = inlined_call_operand.hbm [shape: f32[16,128], index: 0, kind: input, shape index: {}]
  %s1 = inlined_call_operand.hbm [shape: f32[16,128], index: 1, kind: input, shape index: {}]
  %s2 = inlined_call_operand.hbm [shape: f32[1,1,128], index: 2, kind: output, shape index: {}]
  %s3 = sld [smem:[#allocation0]]
  $region34: #{tpu_custom_call.1} parent=0
    _
  %s5 = ssub.s32 1, %s3
  %s6 = scalar_select 0, %s5, %s3
  $region1: #{tpu_custom_call.1} parent=0
    #allocation3 [shape = 'u8[8192]{0}', space=vmem, size = 0x2000, scoped, tag = 'input window, operand 0, single buffered']
    #allocation4 [shape = 's32[1]{0}', space=sflag, size = 0x4, scoped, tag = 'scoped memory for tpu_custom_call.1']
    #allocation5 [shape = 's32[1]{0}', space=sflag, size = 0x4, scoped, tag = 'scoped memory for tpu_custom_call.1']
    #allocation6 [shape = 'u8[8192]{0}', space=vmem, size = 0x2000, scoped, tag = 'input window, operand 1, single buffered']
    #allocation7 [shape = 's32[1]{0}', space=sflag, size = 0x4, scoped, tag = 'scoped memory for tpu_custom_call.1']
    #allocation8 [shape = 'u8[512]{0}', space=vmem, size = 0x400, scoped, tag = 'output window, operand 0, single buffered']
    %7 = vsyncpa [#allocation4], 0
    %8 = vsyncpa [#allocation7], 0
    %9 = vsyncpa [#allocation5], 0
    // Predicated region
    $region2: #{tpu_custom_call.1} parent=1 // pred_check
      _
    $region3: #{tpu_custom_call.1} parent=1 // pred_check_branch
      %11 = sbr.rel (0) target = $region5
    $region4: #{tpu_custom_call.1} parent=1 // pred_region
      %s12 = sadd.s32 0, 0
      %s13 = smul.u32 2, %s12
      %s15 = ssub.s32 256, 256
      %16 = vsyncadd [#allocation4], %s15
      %s17 = smul.addr %s13, 128
      %s18 = scalar_lea.hbm %s0, %s17
      %s19 = sshll.u32 [#allocation3], 4
      %s20 = int_to_ptr.vmem [resolvable:$true] %s19
      %25 = dma.hbm_to_vmem [thread:$0]  %s18, 256, %s20, [#allocation4], 128, 128, 8
    $region5: #{tpu_custom_call.1} parent=1 // pred_fallthru
      _
    // Predicated region
    $region6: #{tpu_custom_call.1} parent=1 // pred_check
      _
    $region7: #{tpu_custom_call.1} parent=1 // pred_check_branch
      %27 = sbr.rel (0) target = $region9
    $region8: #{tpu_custom_call.1} parent=1 // pred_region
      %s28 = sadd.s32 0, 0
      %s29 = smul.u32 2, %s28
      %s31 = ssub.s32 256, 256
      %32 = vsyncadd [#allocation7], %s31
      %s33 = smul.addr %s29, 128
      %s34 = scalar_lea.hbm %s1, %s33
      %s35 = sshll.u32 [#allocation6], 4
      %s36 = int_to_ptr.vmem [resolvable:$true] %s35
      %41 = dma.hbm_to_vmem [thread:$0]  %s34, 256, %s36, [#allocation7], 128, 128, 8
    $region9: #{tpu_custom_call.1} parent=1 // pred_fallthru
      _
    // Predicated region
    $region10: #{tpu_custom_call.1} parent=1 // pred_check
      _
    $region11: #{tpu_custom_call.1} parent=1 // pred_check_branch
      %43 = sbr.rel (0) target = $region13
    $region12: #{tpu_custom_call.1} parent=1 // pred_region
      %44 = dma.done [#allocation4], 256
    $region13: #{tpu_custom_call.1} parent=1 // pred_fallthru
      _
    // Predicated region
    $region14: #{tpu_custom_call.1} parent=1 // pred_check
      _
    $region15: #{tpu_custom_call.1} parent=1 // pred_check_branch
      %46 = sbr.rel (0) target = $region17
    $region16: #{tpu_custom_call.1} parent=1 // pred_region
      %47 = dma.done [#allocation7], 256
    $region17: #{tpu_custom_call.1} parent=1 // pred_fallthru
      _
    %s48 = sadd.s32 0, 0
    %s49 = smul.u32 2, %s48
    %s50 = sadd.s32 0, 0
    %s51 = smul.u32 2, %s50
    %p52 = scmp.eq.s32.totalorder 0, 0
    // Predicated region
    $region18: #{tpu_custom_call.1} parent=1 // pred_check
      %p53 = pneg %p52
    $region19: #{tpu_custom_call.1} parent=1 // pred_check_branch
      %55 = sbr.rel (%p53) target = $region21
    $region20: #{tpu_custom_call.1} parent=1 // pred_region
      %56 = vst [vmem:[#allocation2] sm:$0xff] 0.0
    $region21: #{tpu_custom_call.1} parent=1 // pred_fallthru
      _
    %v57 = vld [vmem:[#allocation3] sm:$0xff]
    %v58 = vld [vmem:[#allocation3 + $0x8] sm:$0xff]
    %v59 = vld [vmem:[#allocation6] sm:$0xff]
    %v60 = vld [vmem:[#allocation6 + $0x8] sm:$0xff]
    %v61 = vand.u32 2147483647, %v57
    %v62 = vand.u32 2147483647, %v58
    %v63 = vsub.f32 0.0, %v61
    %v64 = vsub.f32 0.0, %v62
    %v65 = vmul.f32 %v63, 1.442695
    %v66 = vpow.pop %v65
    %v67 = vmul.f32 %v64, 1.442695
    %v68 = vpow.pop %v67
    %v69 = vmax.f32 %v57, 0.0
    %v70 = vmax.f32 %v58, 0.0
    %v71 = vmul.f32 %v57, %v59
    %v72 = vmul.f32 %v58, %v60
    %v73 = vsub.f32 %v69, %v71
    %v74 = vsub.f32 %v70, %v72
    %v75 = vadd.f32 %v66, 1.0
    %v76 = vlog2.pop %v75
    %v77 = vmul.f32 %v76, 0.6931472
    %v78 = vmul.f32 -0.5, %v66
    %v79 = vadd.f32 %v78, 1.0
    %v80 = vmul.f32 %v79, %v66
    %v81 = vand.u32 2147483647, %v66
    %vm82 = vcmp.lt.f32.partialorder %v81, 0.0004427343
    %v83 = vsel %vm82, %v80, %v77
    %v84 = vadd.f32 %v68, 1.0
    %v85 = vlog2.pop %v84
    %v86 = vmul.f32 %v85, 0.6931472
    %v87 = vmul.f32 -0.5, %v68
    %v88 = vadd.f32 %v87, 1.0
    %v89 = vmul.f32 %v88, %v68
    %v90 = vand.u32 2147483647, %v68
    %vm91 = vcmp.lt.f32.partialorder %v90, 0.0004427343
    %v92 = vsel %vm91, %v89, %v86
    %v93 = vadd.f32 %v73, %v83
    %v94 = vadd.f32 %v74, %v92
    %vm95 = vcmp.ge.f32.partialorder %v57, 0.0
    %vm96 = vcmp.ge.f32.partialorder %v58, 0.0
    %v97 = vsel %vm95, 1.0, %v66
    %v98 = vsel %vm96, 1.0, %v68
    %v99 = vadd.f32 %v66, 1.0
    %v100 = vadd.f32 %v68, 1.0
    %v101 = vrcp.pop %v99
    %v102 = vmul.f32 %v97, %v101
    %v103 = vrcp.pop %v100
    %v104 = vmul.f32 %v98, %v103
    %v105 = vsub.f32 %v102, %v59
    %v106 = vsub.f32 %v104, %v60
    %v107 = vsub.f32 %v105, 1.0
    %v108 = vsub.f32 %v106, 1.0
    %v109 = vmul.f32 %v107, 19.96008
    %v110 = vmul.f32 %v108, 19.96008
    %v111 = vmul.f32 %v109, 1.442695
    %v112 = vpow.pop %v111
    %v113 = vmul.f32 %v110, 1.442695
    %v114 = vpow.pop %v113
    %v115 = vsub.f32 1.0, %v112
    %v116 = vsub.f32 1.0, %v114
    %v117 = vmul.f32 %v93, %v115
    %v118 = vmul.f32 %v94, %v116
    %v119 = vld [vmem:[#allocation2] sm:$0xff]
    %v120 = vadd.f32 %v117, %v118
    %v121 = vadd.f32 %v119, %v120
    %122 = vst [vmem:[#allocation2] sm:$0xff] %v121
    // Predicated region
    $region22: #{tpu_custom_call.1} parent=1 // pred_check
      %p123 = pneg %p52
    $region23: #{tpu_custom_call.1} parent=1 // pred_check_branch
      %125 = sbr.rel (%p123) target = $region25
    $region24: #{tpu_custom_call.1} parent=1 // pred_region
      %v126 = vld [vmem:[#allocation2] sm:$0xff]
      %v127 = vrot.slane %v126, 4
      %v128 = vadd.f32 %v126, %v127
      %v129 = vrot.slane %v128, 2
      %v130 = vadd.f32 %v128, %v129
      %v131 = vrot.slane %v130, 1
      %v132 = vadd.f32 %v130, %v131
      %133 = vst [vmem:[#allocation8] sm:$0x1] %v132
    $region25: #{tpu_custom_call.1} parent=1 // pred_fallthru
      _
    // Predicated region
    $region26: #{tpu_custom_call.1} parent=1 // pred_check
      _
    $region27: #{tpu_custom_call.1} parent=1 // pred_check_branch
      %135 = sbr.rel (0) target = $region29
    $region28: #{tpu_custom_call.1} parent=1 // pred_region
      %s137 = ssub.s32 16, 16
      %138 = vsyncadd [#allocation5], %s137
      %s140 = sshll.u32 [#allocation8], 4
      %s141 = int_to_ptr.vmem [resolvable:$true] %s140
      %143 = dma.vmem_to_hbm [thread:$0]  %s141, 16, %s2, [#allocation5]
    $region29: #{tpu_custom_call.1} parent=1 // pred_fallthru
      _
    // Predicated region
    $region30: #{tpu_custom_call.1} parent=1 // pred_check
      _
    $region31: #{tpu_custom_call.1} parent=1 // pred_check_branch
      %145 = sbr.rel (0) target = $region33
    $region32: #{tpu_custom_call.1} parent=1 // pred_region
      %146 = dma.done [#allocation5], 16
    $region33: #{tpu_custom_call.1} parent=1 // pred_fallthru
      _
    %147 = vsyncpa [#allocation4], 1
    %148 = vsyncpa [#allocation7], 1
    %149 = vsyncpa [#allocation5], 1

</llo_original>
